<compile_context>
chip_gen: v7x
topology: tpu7x:2x2x1
jax: 0.10.0
libtpu: 0.0.40
codegen_flags: <defaults>
</compile_context>

<pallas_src>
import numpy as np
import jax
import jax.numpy as jnp
from jax.experimental import pallas as pl
from jax.experimental.pallas import tpu as pltpu

# ------------------ configuration (mirrors the module constructor) ------------------
B = 2                   # batch
LATENT = 8              # latent_dim
D = 4                   # input_dim
T = 16                  # n_lags
HIDDEN = (8, 16)        # hidden_layer_sizes
BN_EPS = 1e-5           # nn.BatchNorm1d default


def conv_length(length, n_layers, kernel=3, stride=2, padding=1):
    for _ in range(n_layers):
        length = int((length + 2 * padding - kernel) / 2 + 1)
    return length


def inverse_conv_length(length, n_layers, kernel=3, stride=2, padding=1):
    for _ in range(n_layers):
        length = int((length - 1) * stride - 2 * padding + kernel)
    return length


L0 = conv_length(T, len(HIDDEN))            # 4   length fed to first ConvTranspose1d
C0 = HIDDEN[-1]                             # 16  channels fed to first ConvTranspose1d
C1 = HIDDEN[0]                              # 8   channels after first ConvTranspose1d
L1 = 2 * L0 - 1                             # 7
L2 = inverse_conv_length(L0, len(HIDDEN))   # 13  final conv length
assert L2 == 2 * L1 - 1

# ------------------ packed-slab layout (host <-> kernel contract) ------------------
def _pad8(n):
    return ((n + 7) // 8) * 8


W_COLS = max(C0 * L0, C1 * L1, D * L2, T * D)     # 64 lanes for every weight sub-block
ROW_FW = 0                                        # first_linear weight  [LATENT, C0*L0]
ROW_M0 = ROW_FW + _pad8(LATENT)                   # folded conv0         [C0*L0, C1*L1]
ROW_M1 = ROW_M0 + _pad8(C0 * L0)                  # folded conv1         [C1*L1, D*L2]
ROW_WL = ROW_M1 + _pad8(C1 * L1)                  # last_linear weight   [D*L2, T*D]
W_ROWS = ROW_WL + _pad8(D * L2)                   # 184
B_ROWS = 8                                        # bias slab: fb, b0, gamma, beta, b1, bl


# ----------------------------------- Pallas kernel ----------------------------------
def residual_block_kernel(z_ref, w_ref, b_ref, out_ref):
    f32 = jnp.float32

    def dot(a, b):
        return jnp.dot(a, b, preferred_element_type=f32)

    z = z_ref[...]                                              # [B, LATENT]

    # Static slices of the packed weight slab (zero-cost ref views, 8-row aligned).
    wf = w_ref[ROW_FW:ROW_FW + LATENT, 0:C0 * L0]               # [8, 64]
    m0 = w_ref[ROW_M0:ROW_M0 + C0 * L0, 0:C1 * L1]              # [64, 56]
    m1 = w_ref[ROW_M1:ROW_M1 + C1 * L1, 0:D * L2]               # [56, 52]
    wl = w_ref[ROW_WL:ROW_WL + D * L2, 0:T * D]                 # [52, 64]

    bf = b_ref[0:1, 0:C0 * L0]                                  # [1, 64]
    b0 = b_ref[1:2, 0:C1 * L1]                                  # [1, 56]
    bg = b_ref[2:3, 0:C1]                                       # [1, 8]  BN gamma
    bb = b_ref[3:4, 0:C1]                                       # [1, 8]  BN beta
    b1 = b_ref[4:5, 0:D * L2]                                   # [1, 52]
    bl = b_ref[5:6, 0:T * D]                                    # [1, 64]

    # first_linear(z).reshape(B, C0, L0): the flat c-major layout IS that reshape.
    h = dot(z, wf) + bf                                         # [B, C0*L0]

    # ConvTranspose1d(C0->C1, k=3, s=2, p=1) folded into one block-sparse 2D matmul.
    h = dot(h, m0) + b0                                         # [B, C1*L1]

    # BatchNorm1d(C1): training-mode biased batch statistics over (batch, length).
    # TODO(synk): eval-mode running_mean/running_var not ported; a fresh torch module
    # runs in training mode, which this matches.
    h3 = h.reshape(B, C1, L1)                                   # single-vreg 3D view for BN
    denom = 1.0 / float(B * L1)
    mean = jnp.sum(jnp.sum(h3, axis=2, keepdims=True), axis=0, keepdims=True) * denom
    var = jnp.sum(jnp.sum((h3 - mean) ** 2, axis=2, keepdims=True),
                  axis=0, keepdims=True) * denom
    scale = bg.reshape(1, C1, 1) * jax.lax.rsqrt(var + BN_EPS)
    shift = bb.reshape(1, C1, 1) - mean * scale
    h = jnp.maximum(h3 * scale + shift, 0.0).reshape(B, C1 * L1)

    # ConvTranspose1d(C1->D) folded; output flat layout equals torch .flatten(1).
    h = jnp.maximum(dot(h, m1) + b1, 0.0)                       # [B, D*L2]

    # last_linear -> lane-dense flat [B, T*D] store (wrapper reshapes to [B, T, D]).
    out_ref[...] = dot(h, wl) + bl


@jax.jit
def decoder_residual_block_forward(z, w_slab, b_slab):
    vmem = pl.BlockSpec(memory_space=pltpu.MemorySpace.VMEM)
    # grid=() single program: everything fits in VMEM (~60 KiB resident).
    # For a real batch (B >> 2) add a leading batch grid axis with
    # dimension_semantics=("parallel",) so both v7x TensorCores are used.
    out_flat = pl.pallas_call(
        residual_block_kernel,
        out_shape=jax.ShapeDtypeStruct((B, T * D), jnp.float32),
        in_specs=[vmem, vmem, vmem],
        out_specs=vmem,
    )(z, w_slab, b_slab)
    # torch: .reshape([batch, -1, input_dim]) -> [B, n_lags, input_dim]
    return out_flat.reshape(B, T, D)


# -------------------------- host-side parameter folding -----------------------------
def init_params(key):
    # Linear weights stored already transposed ([in, out] = torch_weight.T);
    # ConvTranspose1d weights use the torch layout [Cin, Cout, K].
    names_shapes = [
        ("fw", (LATENT, C0 * L0)), ("fb", (C0 * L0,)),     # first_linear_layer
        ("c0w", (C0, C1, 3)), ("c0b", (C1,)),              # ConvTranspose1d 16->8
        ("c1w", (C1, D, 3)), ("c1b", (D,)),                # ConvTranspose1d 8->4
        ("llw", (D * L2, T * D)), ("llb", (T * D,)),       # last_linear_layer
    ]
    keys = jax.random.split(key, len(names_shapes))
    p = {n: 0.1 * jax.random.normal(k, s, dtype=jnp.float32)
         for k, (n, s) in zip(keys, names_shapes)}
    p["bng"] = jnp.ones((C1,), jnp.float32)    # BatchNorm1d weight init (ones)
    p["bnb"] = jnp.zeros((C1,), jnp.float32)   # BatchNorm1d bias init (zeros)
    return p


def _conv_transpose_as_matrix(w_iok, bias, l_in):
    """ConvTranspose1d(k=3, s=2, p=1) as an exact block-sparse matrix.

    out[:, :, 2i]   = x[:, :, i]   @ W[:, :, 1]
    out[:, :, 2i+1] = x[:, :, i+1] @ W[:, :, 0] + x[:, :, i] @ W[:, :, 2]
    Flat layouts are channel-major (c*L + l) on both sides.
    """
    c_in, c_out, _ = w_iok.shape
    l_out = 2 * l_in - 1
    m = np.zeros((c_in * l_in, c_out * l_out), np.float32)
    for ci in range(c_in):
        for co in range(c_out):
            w0, w1, w2 = w_iok[ci, co, 0], w_iok[ci, co, 1], w_iok[ci, co, 2]
            for i in range(l_in):
                m[ci * l_in + i, co * l_out + 2 * i] += w1
                if i + 1 < l_in:
                    m[ci * l_in + i, co * l_out + 2 * i + 1] += w2
                if i >= 1:
                    m[ci * l_in + i, co * l_out + 2 * i - 1] += w0
    bvec = np.repeat(np.asarray(bias, np.float32), l_out)      # channel-major bias
    return m, bvec


def fold_params(p):
    """Fold conv-transposes into block-sparse 2D matrices and pack everything into
    two VMEM slabs (weights + biases/BN affine) -> the kernel takes 3 inputs."""
    m0, b0 = _conv_transpose_as_matrix(np.asarray(p["c0w"]), np.asarray(p["c0b"]), L0)
    m1, b1 = _conv_transpose_as_matrix(np.asarray(p["c1w"]), np.asarray(p["c1b"]), L1)

    w_slab = np.zeros((W_ROWS, W_COLS), np.float32)
    w_slab[ROW_FW:ROW_FW + LATENT, :C0 * L0] = np.asarray(p["fw"])
    w_slab[ROW_M0:ROW_M0 + C0 * L0, :C1 * L1] = m0
    w_slab[ROW_M1:ROW_M1 + C1 * L1, :D * L2] = m1
    w_slab[ROW_WL:ROW_WL + D * L2, :T * D] = np.asarray(p["llw"])

    b_slab = np.zeros((B_ROWS, W_COLS), np.float32)
    b_slab[0, :C0 * L0] = np.asarray(p["fb"])
    b_slab[1, :C1 * L1] = b0
    b_slab[2, :C1] = np.asarray(p["bng"])
    b_slab[3, :C1] = np.asarray(p["bnb"])
    b_slab[4, :D * L2] = b1
    b_slab[5, :T * D] = np.asarray(p["llb"])

    return jnp.asarray(w_slab), jnp.asarray(b_slab)


# -------------------- exact float64 NumPy reference (torch semantics) ---------------
def _np_conv_transpose1d(x, w, b, stride=2, padding=1):
    bsz, _, l_in = x.shape
    _, c_out, k = w.shape
    l_out = (l_in - 1) * stride - 2 * padding + k
    y = np.zeros((bsz, c_out, l_out), np.float64)
    for i in range(l_in):
        for kk in range(k):
            j = i * stride - padding + kk
            if 0 <= j < l_out:
                y[:, :, j] += x[:, :, i] @ w[:, :, kk]
    return y + b.reshape(1, -1, 1)


def reference_forward(z, p):
    f64 = lambda a: np.asarray(a, np.float64)
    z = f64(z)
    h = z @ f64(p["fw"]) + f64(p["fb"])
    h = h.reshape(B, C0, L0)
    h = _np_conv_transpose1d(h, f64(p["c0w"]), f64(p["c0b"]))
    mean = h.mean(axis=(0, 2), keepdims=True)
    var = ((h - mean) ** 2).mean(axis=(0, 2), keepdims=True)
    h = (f64(p["bng"]).reshape(1, -1, 1) * (h - mean) / np.sqrt(var + BN_EPS)
         + f64(p["bnb"]).reshape(1, -1, 1))
    h = np.maximum(h, 0.0)
    h = _np_conv_transpose1d(h, f64(p["c1w"]), f64(p["c1b"]))
    h = np.maximum(h, 0.0).reshape(B, -1)
    out = h @ f64(p["llw"]) + f64(p["llb"])
    return out.reshape(B, T, D)


if __name__ == "__main__":
    key = jax.random.PRNGKey(0)
    kz, kp = jax.random.split(key)
    params = init_params(kp)
    w_slab, b_slab = fold_params(params)
    z = jax.random.normal(kz, (B, LATENT), dtype=jnp.float32)

    out = jax.block_until_ready(decoder_residual_block_forward(z, w_slab, b_slab))
    assert out.shape == (B, T, D)

    ref = reference_forward(np.asarray(z), params)
    # Tolerance reflects default MXU matmul precision (bf16-input passes) versus the
    # exact float64 reference; the 'highest' precision flag was removed per perf review.
    err = float(np.max(np.abs(np.asarray(out, np.float64) - ref)))
    assert err < 1e-2, err
    print("KERNEL_OK")
</pallas_src>

<mosaic_0001>
module attributes {stable_mosaic.version = 11 : i64} {
  func.func @residual_block_kernel(%arg0: memref<2x8xf32, #tpu.memory_space<vmem>>, %arg1: memref<184x64xf32, #tpu.memory_space<vmem>>, %arg2: memref<8x64xf32, #tpu.memory_space<vmem>>, %arg3: memref<2x64xf32, #tpu.memory_space<vmem>>) attributes {dimension_semantics = [], scalar_prefetch = 0 : i64, scratch_operands = 0 : i64, tpu.core_type = #tpu.core_type<tc>} {
    %c0 = arith.constant 0 : index
    %c0_0 = arith.constant 0 : index
    %0 = vector.load %arg0[%c0, %c0_0] : memref<2x8xf32, #tpu.memory_space<vmem>>, vector<2x8xf32>
    %c0_1 = arith.constant 0 : index
    %c0_2 = arith.constant 0 : index
    %1 = vector.load %arg1[%c0_1, %c0_2] : memref<184x64xf32, #tpu.memory_space<vmem>>, vector<8x64xf32>
    %c8 = arith.constant 8 : index
    %c0_3 = arith.constant 0 : index
    %2 = vector.load %arg1[%c8, %c0_3] : memref<184x64xf32, #tpu.memory_space<vmem>>, vector<64x56xf32>
    %c72 = arith.constant 72 : index
    %c0_4 = arith.constant 0 : index
    %3 = vector.load %arg1[%c72, %c0_4] : memref<184x64xf32, #tpu.memory_space<vmem>>, vector<56x52xf32>
    %c128 = arith.constant 128 : index
    %c0_5 = arith.constant 0 : index
    %4 = vector.load %arg1[%c128, %c0_5] : memref<184x64xf32, #tpu.memory_space<vmem>>, vector<52x64xf32>
    %c0_6 = arith.constant 0 : index
    %c0_7 = arith.constant 0 : index
    %5 = vector.load %arg2[%c0_6, %c0_7] : memref<8x64xf32, #tpu.memory_space<vmem>>, vector<1x64xf32>
    %c1 = arith.constant 1 : index
    %c0_8 = arith.constant 0 : index
    %6 = vector.load %arg2[%c1, %c0_8] : memref<8x64xf32, #tpu.memory_space<vmem>>, vector<1x56xf32>
    %c2 = arith.constant 2 : index
    %c0_9 = arith.constant 0 : index
    %7 = vector.load %arg2[%c2, %c0_9] : memref<8x64xf32, #tpu.memory_space<vmem>>, vector<1x8xf32>
    %c3 = arith.constant 3 : index
    %c0_10 = arith.constant 0 : index
    %8 = vector.load %arg2[%c3, %c0_10] : memref<8x64xf32, #tpu.memory_space<vmem>>, vector<1x8xf32>
    %c4 = arith.constant 4 : index
    %c0_11 = arith.constant 0 : index
    %9 = vector.load %arg2[%c4, %c0_11] : memref<8x64xf32, #tpu.memory_space<vmem>>, vector<1x52xf32>
    %c5 = arith.constant 5 : index
    %c0_12 = arith.constant 0 : index
    %10 = vector.load %arg2[%c5, %c0_12] : memref<8x64xf32, #tpu.memory_space<vmem>>, vector<1x64xf32>
    %cst = arith.constant dense<0.000000e+00> : vector<2x64xf32>
    %11 = tpu.matmul %0, %1, %cst {dimension_numbers = #tpu.dot_dimension_numbers<[1], [0], [0], [1], [0, 0, 1, 1], [], []>} : vector<2x8xf32>, vector<8x64xf32>, vector<2x64xf32> -> vector<2x64xf32>
    %12 = vector.broadcast %5 : vector<1x64xf32> to vector<2x64xf32>
    %13 = arith.addf %11, %12 : vector<2x64xf32>
    %cst_13 = arith.constant dense<0.000000e+00> : vector<2x56xf32>
    %14 = tpu.matmul %13, %2, %cst_13 {dimension_numbers = #tpu.dot_dimension_numbers<[1], [0], [0], [1], [0, 0, 1, 1], [], []>} : vector<2x64xf32>, vector<64x56xf32>, vector<2x56xf32> -> vector<2x56xf32>
    %15 = vector.broadcast %6 : vector<1x56xf32> to vector<2x56xf32>
    %16 = arith.addf %14, %15 : vector<2x56xf32>
    %17 = vector.shape_cast %16 : vector<2x56xf32> to vector<2x8x7xf32>
    %cst_14 = arith.constant dense<0.000000e+00> : vector<2x8xf32>
    %18 = vector.multi_reduction <add>, %17, %cst_14 [2] : vector<2x8x7xf32> to vector<2x8xf32>
    %19 = vector.shape_cast %18 : vector<2x8xf32> to vector<2x8x1xf32>
    %cst_15 = arith.constant dense<0.000000e+00> : vector<8x1xf32>
    %20 = vector.multi_reduction <add>, %19, %cst_15 [0] : vector<2x8x1xf32> to vector<8x1xf32>
    %21 = vector.shape_cast %20 : vector<8x1xf32> to vector<1x8x1xf32>
    %cst_16 = arith.constant 0.0714285746 : f32
    %22 = vector.broadcast %cst_16 : f32 to vector<1x8x1xf32>
    %23 = arith.mulf %21, %22 : vector<1x8x1xf32>
    %24 = vector.broadcast %23 : vector<1x8x1xf32> to vector<2x8x7xf32>
    %25 = arith.subf %17, %24 : vector<2x8x7xf32>
    %26 = arith.mulf %25, %25 : vector<2x8x7xf32>
    %cst_17 = arith.constant dense<0.000000e+00> : vector<2x8xf32>
    %27 = vector.multi_reduction <add>, %26, %cst_17 [2] : vector<2x8x7xf32> to vector<2x8xf32>
    %28 = vector.shape_cast %27 : vector<2x8xf32> to vector<2x8x1xf32>
    %cst_18 = arith.constant dense<0.000000e+00> : vector<8x1xf32>
    %29 = vector.multi_reduction <add>, %28, %cst_18 [0] : vector<2x8x1xf32> to vector<8x1xf32>
    %30 = vector.shape_cast %29 : vector<8x1xf32> to vector<1x8x1xf32>
    %cst_19 = arith.constant 0.0714285746 : f32
    %31 = vector.broadcast %cst_19 : f32 to vector<1x8x1xf32>
    %32 = arith.mulf %30, %31 : vector<1x8x1xf32>
    %33 = vector.shape_cast %7 : vector<1x8xf32> to vector<1x8x1xf32>
    %cst_20 = arith.constant 9.99999974E-6 : f32
    %34 = vector.broadcast %cst_20 : f32 to vector<1x8x1xf32>
    %35 = arith.addf %32, %34 : vector<1x8x1xf32>
    %36 = math.rsqrt %35 : vector<1x8x1xf32>
    %37 = arith.mulf %33, %36 : vector<1x8x1xf32>
    %38 = vector.shape_cast %8 : vector<1x8xf32> to vector<1x8x1xf32>
    %39 = arith.mulf %23, %37 : vector<1x8x1xf32>
    %40 = arith.subf %38, %39 : vector<1x8x1xf32>
    %41 = vector.broadcast %37 : vector<1x8x1xf32> to vector<2x8x7xf32>
    %42 = arith.mulf %17, %41 : vector<2x8x7xf32>
    %43 = vector.broadcast %40 : vector<1x8x1xf32> to vector<2x8x7xf32>
    %44 = arith.addf %42, %43 : vector<2x8x7xf32>
    %cst_21 = arith.constant 0.000000e+00 : f32
    %45 = vector.broadcast %cst_21 : f32 to vector<2x8x7xf32>
    %46 = arith.maximumf %44, %45 : vector<2x8x7xf32>
    %47 = vector.shape_cast %46 : vector<2x8x7xf32> to vector<2x56xf32>
    %cst_22 = arith.constant dense<0.000000e+00> : vector<2x52xf32>
    %48 = tpu.matmul %47, %3, %cst_22 {dimension_numbers = #tpu.dot_dimension_numbers<[1], [0], [0], [1], [0, 0, 1, 1], [], []>} : vector<2x56xf32>, vector<56x52xf32>, vector<2x52xf32> -> vector<2x52xf32>
    %49 = vector.broadcast %9 : vector<1x52xf32> to vector<2x52xf32>
    %50 = arith.addf %48, %49 : vector<2x52xf32>
    %cst_23 = arith.constant 0.000000e+00 : f32
    %51 = vector.broadcast %cst_23 : f32 to vector<2x52xf32>
    %52 = arith.maximumf %50, %51 : vector<2x52xf32>
    %cst_24 = arith.constant dense<0.000000e+00> : vector<2x64xf32>
    %53 = tpu.matmul %52, %4, %cst_24 {dimension_numbers = #tpu.dot_dimension_numbers<[1], [0], [0], [1], [0, 0, 1, 1], [], []>} : vector<2x52xf32>, vector<52x64xf32>, vector<2x64xf32> -> vector<2x64xf32>
    %54 = vector.broadcast %10 : vector<1x64xf32> to vector<2x64xf32>
    %55 = arith.addf %53, %54 : vector<2x64xf32>
    %c0_25 = arith.constant 0 : index
    %c0_26 = arith.constant 0 : index
    %56 = vector.load %arg3[%c0_25, %c0_26] : memref<2x64xf32, #tpu.memory_space<vmem>>, vector<2x64xf32>
    tpu.vector_store %arg3[%c0_25, %c0_26], %55 {strides = array<i32>} : memref<2x64xf32, #tpu.memory_space<vmem>>, vector<2x64xf32>,
    return
  }
}

</mosaic_0001>

<llo_original>
// kernel: decoder_residual_block_forward.1
$region0: #{decoder_residual_block_forward.1}
  #allocation0 [shape = 'u32[]', space=smem, size = 0x4, offset = 0x4, fixed_abs, tag = 'smem constant byte address 0x4 - core index']
  #allocation1 [shape = 'u32[144,128]{1,0:T(1,128)}', space=vmem, size = 0x12000, scoped, tag = 'internal scratch']
  %s0 = inlined_call_operand.vmem [shape: f32[2,8], index: 0, kind: input, shape index: {}]
  %s1 = inlined_call_operand.vmem [shape: f32[184,64], index: 1, kind: input, shape index: {}]
  %s2 = inlined_call_operand.vmem [shape: f32[8,64], index: 2, kind: input, shape index: {}]
  %s3 = inlined_call_operand.vmem [shape: f32[2,64], index: 3, kind: output, shape index: {}]
  %s4 = sld [smem:[#allocation0]]
  $region22: #{decoder_residual_block_forward.1} parent=0
    _
  %s6 = ssub.s32 1, %s4
  %s7 = scalar_select 0, %s6, %s4
  // Predicated region
  $region2: #{decoder_residual_block_forward.1} parent=0 // pred_check
    _
  $region3: #{decoder_residual_block_forward.1} parent=0 // pred_check_branch
    %9 = sbr.rel (0) target = $region5
  $region4: #{decoder_residual_block_forward.1} parent=0 // pred_region
    _
  $region5: #{decoder_residual_block_forward.1} parent=0 // pred_fallthru
    _
  // Predicated region
  $region6: #{decoder_residual_block_forward.1} parent=0 // pred_check
    _
  $region7: #{decoder_residual_block_forward.1} parent=0 // pred_check_branch
    %11 = sbr.rel (0) target = $region9
  $region8: #{decoder_residual_block_forward.1} parent=0 // pred_region
    _
  $region9: #{decoder_residual_block_forward.1} parent=0 // pred_fallthru
    _
  // Predicated region
  $region10: #{decoder_residual_block_forward.1} parent=0 // pred_check
    _
  $region11: #{decoder_residual_block_forward.1} parent=0 // pred_check_branch
    %13 = sbr.rel (0) target = $region13
  $region12: #{decoder_residual_block_forward.1} parent=0 // pred_region
    _
  $region13: #{decoder_residual_block_forward.1} parent=0 // pred_fallthru
    _
  %v14 = vld [vmem:[%s0] sm:$0x3]
  %v15 = vld [vmem:[%s1] sm:$0xff]
  %v16 = vld [vmem:[%s1 + $0x8] sm:$0xff]
  %v17 = vld [vmem:[%s1 + $0x10] sm:$0xff]
  %v18 = vld [vmem:[%s1 + $0x18] sm:$0xff]
  %v19 = vld [vmem:[%s1 + $0x20] sm:$0xff]
  %v20 = vld [vmem:[%s1 + $0x28] sm:$0xff]
  %v21 = vld [vmem:[%s1 + $0x30] sm:$0xff]
  %v22 = vld [vmem:[%s1 + $0x38] sm:$0xff]
  %v23 = vld [vmem:[%s1 + $0x40] sm:$0xff]
  %v24 = vld [vmem:[%s1 + $0x48] sm:$0xff]
  %v25 = vld [vmem:[%s1 + $0x50] sm:$0xff]
  %v26 = vld [vmem:[%s1 + $0x58] sm:$0xff]
  %v27 = vld [vmem:[%s1 + $0x60] sm:$0xff]
  %v28 = vld [vmem:[%s1 + $0x68] sm:$0xff]
  %v29 = vld [vmem:[%s1 + $0x70] sm:$0xff]
  %v30 = vld [vmem:[%s1 + $0x78] sm:$0xff]
  %v31 = vld [vmem:[%s1 + $0x80] sm:$0xff]
  %v32 = vld [vmem:[%s1 + $0x88] sm:$0xff]
  %v33 = vld [vmem:[%s1 + $0x90] sm:$0xff]
  %v34 = vld [vmem:[%s1 + $0x98] sm:$0xff]
  %v35 = vld [vmem:[%s1 + $0xa0] sm:$0xff]
  %v36 = vld [vmem:[%s1 + $0xa8] sm:$0xff]
  %v37 = vld [vmem:[%s1 + $0xb0] sm:$0xf]
  %v38 = vld [vmem:[%s2] sm:$0x1]
  %v39 = vld [vmem:[%s2 + $0x1] sm:$0x1]
  %v40 = vld [vmem:[%s2 + $0x2] sm:$0x1]
  %v41 = vld [vmem:[%s2 + $0x3] sm:$0x1]
  %v42 = vld [vmem:[%s2 + $0x4] sm:$0x1]
  %v43 = vld [vmem:[%s2 + $0x5] sm:$0x1]
  %v44 = vlaneseq
  %v45 = vshrl.u32 %v44, 7
  %v46 = vsub.s32 0, %v45
  %v47 = vrot.slane %v38, %v46
  %vm48 = vcmask 64512
  %v50 = vsel %vm48, %v14, 0
  %52 = vmatprep.subr.mxu0 0.0
  %53 = vmatpush1.msra.mxu0 %v15
  %54 = vmatprep.subr.mxu0 0.0
  %55 = vmatpush1.msra.mxu0 0.0
  %56 = vmatprep.subr.mxu0 0.0
  %57 = vmatpush1.msra.mxu0 0.0
  %58 = vmatprep.subr.mxu0 0.0
  %59 = vmatpush1.msra.mxu0 0.0
  %60 = vmatprep.subr.mxu0 0.0
  %61 = vmatpush1.msra.mxu0 0.0
  %62 = vmatprep.subr.mxu0 0.0
  %63 = vmatpush1.msra.mxu0 0.0
  %64 = vmatprep.subr.mxu0 0.0
  %65 = vmatpush1.msra.mxu0 0.0
  %66 = vmatprep.subr.mxu0 0.0
  %67 = vmatpush1.msra.mxu0 0.0
  %68 = vmatprep.subr.mxu0 0.0
  %69 = vmatpush1.msra.mxu0 0.0
  %70 = vmatprep.subr.mxu0 0.0
  %71 = vmatpush1.msra.mxu0 0.0
  %72 = vmatprep.subr.mxu0 0.0
  %73 = vmatpush1.msra.mxu0 0.0
  %74 = vmatprep.subr.mxu0 0.0
  %75 = vmatpush1.msra.mxu0 0.0
  %76 = vmatprep.subr.mxu0 0.0
  %77 = vmatpush1.msra.mxu0 0.0
  %78 = vmatprep.subr.mxu0 0.0
  %79 = vmatpush1.msra.mxu0 0.0
  %80 = vmatprep.subr.mxu0 0.0
  %81 = vmatpush1.msra.mxu0 0.0
  %82 = vmatprep.subr.mxu0 0.0
  %83 = vmatpush1.msra.mxu0 0.0
  %84 = vmatprep.subr.mxu0 0.0
  %85 = vmatpush1.msra.mxu0 0.0
  %86 = vmatprep.subr.mxu0 0.0
  %87 = vmatpush1.msra.mxu0 0.0
  %88 = vmatprep.subr.mxu0 0.0
  %89 = vmatpush1.msra.mxu0 0.0
  %90 = vmatprep.subr.mxu0 0.0
  %91 = vmatpush1.msra.mxu0 0.0
  %92 = vmatprep.subr.mxu0 0.0
  %93 = vmatpush1.msra.mxu0 0.0
  %94 = vmatprep.subr.mxu0 0.0
  %95 = vmatpush1.msra.mxu0 0.0
  %96 = vmatprep.subr.mxu0 0.0
  %97 = vmatpush1.msra.mxu0 0.0
  %98 = vmatprep.subr.mxu0 0.0
  %99 = vmatpush1.msra.mxu0 0.0
  %100 = vmatprep.subr.mxu0 0.0
  %101 = vmatpush1.msra.mxu0 0.0
  %102 = vmatprep.subr.mxu0 0.0
  %103 = vmatpush1.msra.mxu0 0.0
  %104 = vmatprep.subr.mxu0 0.0
  %105 = vmatpush1.msra.mxu0 0.0
  %106 = vmatprep.subr.mxu0 0.0
  %107 = vmatpush1.msra.mxu0 0.0
  %108 = vmatprep.subr.mxu0 0.0
  %109 = vmatpush1.msra.mxu0 0.0
  %110 = vmatprep.subr.mxu0 0.0
  %111 = vmatpush1.msra.mxu0 0.0
  %112 = vmatprep.subr.mxu0 0.0
  %113 = vmatpush1.msra.mxu0 0.0
  %114 = vmatprep.subr.mxu0 0.0
  %115 = vmatpush1.msra.mxu0 0.0
  %116 = vmatprep.mubr.f32.mxu0 0.0
  %117 = vmatmul.mubr.f32.gmra.mrb[0].mxu0 %v50
  %v118 = vpop.f32.mrb[0].mxu0
  %v119 = vadd.f32 %v47, %v118
  %v120 = vpop.f32.mrb[0].mxu0
  %121 = vdwg.mxu0
  %v122 = vlaneseq
  %v123 = vshrl.u32 %v122, 7
  %v124 = vsub.s32 0, %v123
  %v125 = vrot.slane %v39, %v124
  %vm126 = vcmask 523264
  %v128 = vsel %vm126, %v119, 0
  %130 = vmatprep.subr.mxu0 0.0
  %131 = vmatpush1.msra.mxu0 %v16
  %132 = vmatprep.subr.mxu0 0.0
  %133 = vmatpush1.msra.mxu0 %v17
  %134 = vmatprep.subr.mxu0 0.0
  %135 = vmatpush1.msra.mxu0 %v18
  %136 = vmatprep.subr.mxu0 0.0
  %137 = vmatpush1.msra.mxu0 %v19
  %138 = vmatprep.subr.mxu0 0.0
  %139 = vmatpush1.msra.mxu0 %v20
  %140 = vmatprep.subr.mxu0 0.0
  %141 = vmatpush1.msra.mxu0 %v21
  %142 = vmatprep.subr.mxu0 0.0
  %143 = vmatpush1.msra.mxu0 %v22
  %144 = vmatprep.subr.mxu0 0.0
  %145 = vmatpush1.msra.mxu0 %v23
  %146 = vmatprep.subr.mxu0 0.0
  %147 = vmatpush1.msra.mxu0 0.0
  %148 = vmatprep.subr.mxu0 0.0
  %149 = vmatpush1.msra.mxu0 0.0
  %150 = vmatprep.subr.mxu0 0.0
  %151 = vmatpush1.msra.mxu0 0.0
  %152 = vmatprep.subr.mxu0 0.0
  %153 = vmatpush1.msra.mxu0 0.0
  %154 = vmatprep.subr.mxu0 0.0
  %155 = vmatpush1.msra.mxu0 0.0
  %156 = vmatprep.subr.mxu0 0.0
  %157 = vmatpush1.msra.mxu0 0.0
  %158 = vmatprep.subr.mxu0 0.0
  %159 = vmatpush1.msra.mxu0 0.0
  %160 = vmatprep.subr.mxu0 0.0
  %161 = vmatpush1.msra.mxu0 0.0
  %162 = vmatprep.subr.mxu0 0.0
  %163 = vmatpush1.msra.mxu0 0.0
  %164 = vmatprep.subr.mxu0 0.0
  %165 = vmatpush1.msra.mxu0 0.0
  %166 = vmatprep.subr.mxu0 0.0
  %167 = vmatpush1.msra.mxu0 0.0
  %168 = vmatprep.subr.mxu0 0.0
  %169 = vmatpush1.msra.mxu0 0.0
  %170 = vmatprep.subr.mxu0 0.0
  %171 = vmatpush1.msra.mxu0 0.0
  %172 = vmatprep.subr.mxu0 0.0
  %173 = vmatpush1.msra.mxu0 0.0
  %174 = vmatprep.subr.mxu0 0.0
  %175 = vmatpush1.msra.mxu0 0.0
  %176 = vmatprep.subr.mxu0 0.0
  %177 = vmatpush1.msra.mxu0 0.0
  %178 = vmatprep.subr.mxu0 0.0
  %179 = vmatpush1.msra.mxu0 0.0
  %180 = vmatprep.subr.mxu0 0.0
  %181 = vmatpush1.msra.mxu0 0.0
  %182 = vmatprep.subr.mxu0 0.0
  %183 = vmatpush1.msra.mxu0 0.0
  %184 = vmatprep.subr.mxu0 0.0
  %185 = vmatpush1.msra.mxu0 0.0
  %186 = vmatprep.subr.mxu0 0.0
  %187 = vmatpush1.msra.mxu0 0.0
  %188 = vmatprep.subr.mxu0 0.0
  %189 = vmatpush1.msra.mxu0 0.0
  %190 = vmatprep.subr.mxu0 0.0
  %191 = vmatpush1.msra.mxu0 0.0
  %192 = vmatprep.subr.mxu0 0.0
  %193 = vmatpush1.msra.mxu0 0.0
  %194 = vmatprep.mubr.f32.mxu0 0.0
  %195 = vmatmul.mubr.f32.gmra.mrb[0].mxu0 %v128
  %v196 = vpop.f32.mrb[0].mxu0
  %v197 = vadd.f32 %v125, %v196
  %v198 = vpop.f32.mrb[0].mxu0
  %199 = vdwg.mxu0
  %201 = vrot.lane.b32.xlu0 %v197, 121
  %v202 = vpop.permute.xlu0 %201
  %204 = vrot.lane.b32.xlu0 %v197, 114
  %v205 = vpop.permute.xlu0 %204
  %207 = vrot.lane.b32.xlu0 %v197, 107
  %v208 = vpop.permute.xlu0 %207
  %210 = vrot.lane.b32.xlu0 %v197, 100
  %v211 = vpop.permute.xlu0 %210
  %213 = vrot.lane.b32.xlu0 %v197, 93
  %v214 = vpop.permute.xlu0 %213
  %216 = vrot.lane.b32.xlu0 %v197, 86
  %v217 = vpop.permute.xlu0 %216
  %219 = vrot.lane.b32.xlu0 %v197, 79
  %v220 = vpop.permute.xlu0 %219
  %v222 = vcombine.low %v197, %v205
  %v224 = vunpack.c.l.s4 1983009808
  %v225 = vunpack.c.0.s8 %v224
  %v226 = vlaneseq
  %v227 = vshrl.u32 %v226, 7
  %v228 = vsub.s32 %v225, %v227
  %v229 = vrot.slane %v222, %v228
  %v230 = vcombine.low %v202, %v208
  %v232 = vunpack.c.l.s4 1983009808
  %v233 = vunpack.c.0.s8 %v232
  %v234 = vlaneseq
  %v235 = vshrl.u32 %v234, 7
  %v236 = vsub.s32 %v233, %v235
  %v237 = vrot.slane %v230, %v236
  %v238 = vcombine.low %v211, %v217
  %v240 = vunpack.c.l.s4 1983009808
  %v241 = vunpack.c.0.s8 %v240
  %v242 = vlaneseq
  %v243 = vshrl.u32 %v242, 7
  %v244 = vsub.s32 %v241, %v243
  %v245 = vrot.slane %v238, %v244
  %v246 = vcombine.low %v214, %v220
  %v248 = vunpack.c.l.s4 1983009808
  %v249 = vunpack.c.0.s8 %v248
  %v250 = vlaneseq
  %v251 = vshrl.u32 %v250, 7
  %v252 = vsub.s32 %v249, %v251
  %v253 = vrot.slane %v246, %v252
  %v254 = vcombine.low %v229, %v237
  %v256 = vunpack.c.l.s4 1934713408
  %v257 = vunpack.c.0.s8 %v256
  %v258 = vlaneseq
  %v259 = vshrl.u32 %v258, 7
  %v260 = vsub.s32 %v257, %v259
  %v261 = vrot.slane %v254, %v260
  %v262 = vcombine.low %v245, %v253
  %v264 = vunpack.c.l.s4 1934713408
  %v265 = vunpack.c.0.s8 %v264
  %v266 = vlaneseq
  %v267 = vshrl.u32 %v266, 7
  %v268 = vsub.s32 %v265, %v267
  %v269 = vrot.slane %v262, %v268
  %v270 = vcombine.low %v261, %v269
  %v271 = vcombine.high %v261, %v269
  %vm272 = vcmask 56320
  %v273 = vsel %vm272, %v270, 0.0
  %274 = vadd.xlane.f32.xlu0 %v273
  %v275 = vpop.xlane.xlu0 %274
  %v276 = vsel %vm272, %v271, 0.0
  %277 = vadd.xlane.f32.xlu0 %v276
  %v278 = vpop.xlane.xlu0 %277
  %v279 = vadd.f32 %v275, %v278
  %v280 = vmul.f32 %v279, 0.071428575
  %v281 = vsub.f32 %v270, %v280
  %v282 = vsub.f32 %v271, %v280
  %v283 = vmul.f32 %v281, %v281
  %v284 = vmul.f32 %v282, %v282
  %v285 = vsel %vm272, %v283, 0.0
  %286 = vadd.xlane.f32.xlu0 %v285
  %v287 = vpop.xlane.xlu0 %286
  %v288 = vsel %vm272, %v284, 0.0
  %289 = vadd.xlane.f32.xlu0 %v288
  %v290 = vpop.xlane.xlu0 %289
  %v291 = vadd.f32 %v287, %v290
  %v292 = vmul.f32 %v291, 0.071428575
  %v293 = vlaneseq
  %v294 = vshrl.u32 %v293, 7
  %v295 = vsub.s32 0, %v294
  %v296 = vrot.slane %v40, %v295
  %298 = vbcast.lane.b32.xlu0 %v296, 256
  %v299 = vpop.permute.xlu0 %298
  %v300 = vadd.f32 %v292, 1e-05
  %v301 = vrsqrt.pop %v300
  %v302 = vmul.f32 %v299, %v301
  %v303 = vlaneseq
  %v304 = vshrl.u32 %v303, 7
  %v305 = vsub.s32 0, %v304
  %v306 = vrot.slane %v41, %v305
  %308 = vbcast.lane.b32.xlu0 %v306, 256
  %v309 = vpop.permute.xlu0 %308
  %v310 = vmul.f32 %v280, %v302
  %v311 = vsub.f32 %v309, %v310
  %v312 = vmul.f32 %v270, %v302
  %v313 = vmul.f32 %v271, %v302
  %v314 = vadd.f32 %v312, %v311
  %v315 = vadd.f32 %v313, %v311
  %v316 = vmax.f32 %v314, 0.0
  %v317 = vmax.f32 %v315, 0.0
  %v318 = vcombine.high %v316, 0.0
  %v320 = vunpack.c.l.s4 1983009808
  %v321 = vunpack.c.0.s8 %v320
  %v322 = vlaneseq
  %v323 = vshrl.u32 %v322, 7
  %v324 = vsub.s32 %v321, %v323
  %v325 = vrot.slane %v316, %v324
  %v327 = vunpack.c.l.s4 1983009808
  %v328 = vunpack.c.0.s8 %v327
  %v329 = vlaneseq
  %v330 = vshrl.u32 %v329, 7
  %v331 = vsub.s32 %v328, %v330
  %v332 = vrot.slane %v318, %v331
  %v333 = vcombine.high %v317, 0.0
  %v335 = vunpack.c.l.s4 1983009808
  %v336 = vunpack.c.0.s8 %v335
  %v337 = vlaneseq
  %v338 = vshrl.u32 %v337, 7
  %v339 = vsub.s32 %v336, %v338
  %v340 = vrot.slane %v317, %v339
  %v342 = vunpack.c.l.s4 1983009808
  %v343 = vunpack.c.0.s8 %v342
  %v344 = vlaneseq
  %v345 = vshrl.u32 %v344, 7
  %v346 = vsub.s32 %v343, %v345
  %v347 = vrot.slane %v333, %v346
  %v348 = vcombine.low %v325, %v340
  %v349 = vcombine.high %v325, %v340
  %v351 = vunpack.c.l.s4 1934713408
  %v352 = vunpack.c.0.s8 %v351
  %v353 = vlaneseq
  %v354 = vshrl.u32 %v353, 7
  %v355 = vsub.s32 %v352, %v354
  %v356 = vrot.slane %v348, %v355
  %v358 = vunpack.c.l.s4 1934713408
  %v359 = vunpack.c.0.s8 %v358
  %v360 = vlaneseq
  %v361 = vshrl.u32 %v360, 7
  %v362 = vsub.s32 %v359, %v361
  %v363 = vrot.slane %v349, %v362
  %v364 = vcombine.low %v332, %v347
  %v365 = vcombine.high %v332, %v347
  %v367 = vunpack.c.l.s4 1934713408
  %v368 = vunpack.c.0.s8 %v367
  %v369 = vlaneseq
  %v370 = vshrl.u32 %v369, 7
  %v371 = vsub.s32 %v368, %v370
  %v372 = vrot.slane %v364, %v371
  %v374 = vunpack.c.l.s4 1934713408
  %v375 = vunpack.c.0.s8 %v374
  %v376 = vlaneseq
  %v377 = vshrl.u32 %v376, 7
  %v378 = vsub.s32 %v375, %v377
  %v379 = vrot.slane %v365, %v378
  %v380 = vcombine.high %v356, 0.0
  %v381 = vcombine.high %v363, 0.0
  %v382 = vcombine.high %v372, 0.0
  %v383 = vcombine.high %v379, 0.0
  %385 = vrot.lane.b32.xlu0 %v380, 7
  %v386 = vpop.permute.xlu0 %385
  %389 = vrot.lane.b32.xlu0 %v363, 14
  %v390 = vpop.permute.xlu0 %389
  %393 = vrot.lane.b32.xlu0 %v381, 21
  %v394 = vpop.permute.xlu0 %393
  %397 = vrot.lane.b32.xlu0 %v372, 28
  %v398 = vpop.permute.xlu0 %397
  %401 = vrot.lane.b32.xlu0 %v382, 35
  %v402 = vpop.permute.xlu0 %401
  %405 = vrot.lane.b32.xlu0 %v379, 42
  %v406 = vpop.permute.xlu0 %405
  %409 = vrot.lane.b32.xlu0 %v383, 49
  %v410 = vpop.permute.xlu0 %409
  %v412 = vsel %vm272, %v356, %v386
  %vm413 = vcmask 113664
  %v414 = vsel %vm413, %v412, %v390
  %vm415 = vcmask 171008
  %v416 = vsel %vm415, %v414, %v394
  %vm417 = vcmask 228352
  %v418 = vsel %vm417, %v416, %v398
  %vm419 = vcmask 285696
  %v420 = vsel %vm419, %v418, %v402
  %vm421 = vcmask 343040
  %v422 = vsel %vm421, %v420, %v406
  %vm423 = vcmask 400384
  %v424 = vsel %vm423, %v422, %v410
  %v425 = vlaneseq
  %v426 = vshrl.u32 %v425, 7
  %v427 = vsub.s32 0, %v426
  %v428 = vrot.slane %v42, %v427
  %vm429 = vcmask 457728
  %v431 = vsel %vm429, %v424, 0
  %433 = vmatprep.subr.mxu0 0.0
  %434 = vmatpush1.msra.mxu0 %v24
  %435 = vmatprep.subr.mxu0 0.0
  %436 = vmatpush1.msra.mxu0 %v25
  %437 = vmatprep.subr.mxu0 0.0
  %438 = vmatpush1.msra.mxu0 %v26
  %439 = vmatprep.subr.mxu0 0.0
  %440 = vmatpush1.msra.mxu0 %v27
  %441 = vmatprep.subr.mxu0 0.0
  %442 = vmatpush1.msra.mxu0 %v28
  %443 = vmatprep.subr.mxu0 0.0
  %444 = vmatpush1.msra.mxu0 %v29
  %445 = vmatprep.subr.mxu0 0.0
  %446 = vmatpush1.msra.mxu0 %v30
  %447 = vmatprep.subr.mxu0 0.0
  %448 = vmatpush1.msra.mxu0 0.0
  %449 = vmatprep.subr.mxu0 0.0
  %450 = vmatpush1.msra.mxu0 0.0
  %451 = vmatprep.subr.mxu0 0.0
  %452 = vmatpush1.msra.mxu0 0.0
  %453 = vmatprep.subr.mxu0 0.0
  %454 = vmatpush1.msra.mxu0 0.0
  %455 = vmatprep.subr.mxu0 0.0
  %456 = vmatpush1.msra.mxu0 0.0
  %457 = vmatprep.subr.mxu0 0.0
  %458 = vmatpush1.msra.mxu0 0.0
  %459 = vmatprep.subr.mxu0 0.0
  %460 = vmatpush1.msra.mxu0 0.0
  %461 = vmatprep.subr.mxu0 0.0
  %462 = vmatpush1.msra.mxu0 0.0
  %463 = vmatprep.subr.mxu0 0.0
  %464 = vmatpush1.msra.mxu0 0.0
  %465 = vmatprep.subr.mxu0 0.0
  %466 = vmatpush1.msra.mxu0 0.0
  %467 = vmatprep.subr.mxu0 0.0
  %468 = vmatpush1.msra.mxu0 0.0
  %469 = vmatprep.subr.mxu0 0.0
  %470 = vmatpush1.msra.mxu0 0.0
  %471 = vmatprep.subr.mxu0 0.0
  %472 = vmatpush1.msra.mxu0 0.0
  %473 = vmatprep.subr.mxu0 0.0
  %474 = vmatpush1.msra.mxu0 0.0
  %475 = vmatprep.subr.mxu0 0.0
  %476 = vmatpush1.msra.mxu0 0.0
  %477 = vmatprep.subr.mxu0 0.0
  %478 = vmatpush1.msra.mxu0 0.0
  %479 = vmatprep.subr.mxu0 0.0
  %480 = vmatpush1.msra.mxu0 0.0
  %481 = vmatprep.subr.mxu0 0.0
  %482 = vmatpush1.msra.mxu0 0.0
  %483 = vmatprep.subr.mxu0 0.0
  %484 = vmatpush1.msra.mxu0 0.0
  %485 = vmatprep.subr.mxu0 0.0
  %486 = vmatpush1.msra.mxu0 0.0
  %487 = vmatprep.subr.mxu0 0.0
  %488 = vmatpush1.msra.mxu0 0.0
  %489 = vmatprep.subr.mxu0 0.0
  %490 = vmatpush1.msra.mxu0 0.0
  %491 = vmatprep.subr.mxu0 0.0
  %492 = vmatpush1.msra.mxu0 0.0
  %493 = vmatprep.subr.mxu0 0.0
  %494 = vmatpush1.msra.mxu0 0.0
  %495 = vmatprep.subr.mxu0 0.0
  %496 = vmatpush1.msra.mxu0 0.0
  %497 = vmatprep.mubr.f32.mxu0 0.0
  %498 = vmatmul.mubr.f32.gmra.mrb[0].mxu0 %v431
  %v499 = vpop.f32.mrb[0].mxu0
  %v500 = vadd.f32 %v428, %v499
  %v501 = vpop.f32.mrb[0].mxu0
  %502 = vdwg.mxu0
  %v503 = vmax.f32 %v500, 0.0
  %v504 = vlaneseq
  %v505 = vshrl.u32 %v504, 7
  %v506 = vsub.s32 0, %v505
  %v507 = vrot.slane %v43, %v506
  %vm508 = vcmask 424960
  %v510 = vsel %vm508, %v503, 0
  %vm512 = vcmask 1043456
  %v514 = vsel %vm512, %v37, 0
  %516 = vmatprep.subr.mxu0 0.0
  %517 = vmatpush1.msra.mxu0 %v31
  %518 = vmatprep.subr.mxu0 0.0
  %519 = vmatpush1.msra.mxu0 %v32
  %520 = vmatprep.subr.mxu0 0.0
  %521 = vmatpush1.msra.mxu0 %v33
  %522 = vmatprep.subr.mxu0 0.0
  %523 = vmatpush1.msra.mxu0 %v34
  %524 = vmatprep.subr.mxu0 0.0
  %525 = vmatpush1.msra.mxu0 %v35
  %526 = vmatprep.subr.mxu0 0.0
  %527 = vmatpush1.msra.mxu0 %v36
  %528 = vmatprep.subr.mxu0 0.0
  %529 = vmatpush1.msra.mxu0 %v514
  %530 = vmatprep.subr.mxu0 0.0
  %531 = vmatpush1.msra.mxu0 0.0
  %532 = vmatprep.subr.mxu0 0.0
  %533 = vmatpush1.msra.mxu0 0.0
  %534 = vmatprep.subr.mxu0 0.0
  %535 = vmatpush1.msra.mxu0 0.0
  %536 = vmatprep.subr.mxu0 0.0
  %537 = vmatpush1.msra.mxu0 0.0
  %538 = vmatprep.subr.mxu0 0.0
  %539 = vmatpush1.msra.mxu0 0.0
  %540 = vmatprep.subr.mxu0 0.0
  %541 = vmatpush1.msra.mxu0 0.0
  %542 = vmatprep.subr.mxu0 0.0
  %543 = vmatpush1.msra.mxu0 0.0
  %544 = vmatprep.subr.mxu0 0.0
  %545 = vmatpush1.msra.mxu0 0.0
  %546 = vmatprep.subr.mxu0 0.0
  %547 = vmatpush1.msra.mxu0 0.0
  %548 = vmatprep.subr.mxu0 0.0
  %549 = vmatpush1.msra.mxu0 0.0
  %550 = vmatprep.subr.mxu0 0.0
  %551 = vmatpush1.msra.mxu0 0.0
  %552 = vmatprep.subr.mxu0 0.0
  %553 = vmatpush1.msra.mxu0 0.0
  %554 = vmatprep.subr.mxu0 0.0
  %555 = vmatpush1.msra.mxu0 0.0
  %556 = vmatprep.subr.mxu0 0.0
  %557 = vmatpush1.msra.mxu0 0.0
  %558 = vmatprep.subr.mxu0 0.0
  %559 = vmatpush1.msra.mxu0 0.0
  %560 = vmatprep.subr.mxu0 0.0
  %561 = vmatpush1.msra.mxu0 0.0
  %562 = vmatprep.subr.mxu0 0.0
  %563 = vmatpush1.msra.mxu0 0.0
  %564 = vmatprep.subr.mxu0 0.0
  %565 = vmatpush1.msra.mxu0 0.0
  %566 = vmatprep.subr.mxu0 0.0
  %567 = vmatpush1.msra.mxu0 0.0
  %568 = vmatprep.subr.mxu0 0.0
  %569 = vmatpush1.msra.mxu0 0.0
  %570 = vmatprep.subr.mxu0 0.0
  %571 = vmatpush1.msra.mxu0 0.0
  %572 = vmatprep.subr.mxu0 0.0
  %573 = vmatpush1.msra.mxu0 0.0
  %574 = vmatprep.subr.mxu0 0.0
  %575 = vmatpush1.msra.mxu0 0.0
  %576 = vmatprep.subr.mxu0 0.0
  %577 = vmatpush1.msra.mxu0 0.0
  %578 = vmatprep.subr.mxu0 0.0
  %579 = vmatpush1.msra.mxu0 0.0
  %580 = vmatprep.mubr.f32.mxu0 0.0
  %581 = vmatmul.mubr.f32.gmra.mrb[0].mxu0 %v510
  %v582 = vpop.f32.mrb[0].mxu0
  %v583 = vadd.f32 %v507, %v582
  %v584 = vpop.f32.mrb[0].mxu0
  %585 = vdwg.mxu0
  %vm586 = vcmask 517120
  %587 = vst.msk [vmem:[%s3] sm:$0x3] %vm586, %v583
  // Predicated region
  $region14: #{decoder_residual_block_forward.1} parent=0 // pred_check
    _
  $region15: #{decoder_residual_block_forward.1} parent=0 // pred_check_branch
    %589 = sbr.rel (0) target = $region17
  $region16: #{decoder_residual_block_forward.1} parent=0 // pred_region
    _
  $region17: #{decoder_residual_block_forward.1} parent=0 // pred_fallthru
    _
  // Predicated region
  $region18: #{decoder_residual_block_forward.1} parent=0 // pred_check
    _
  $region19: #{decoder_residual_block_forward.1} parent=0 // pred_check_branch
    %591 = sbr.rel (0) target = $region21
  $region20: #{decoder_residual_block_forward.1} parent=0 // pred_region
    _
  $region21: #{decoder_residual_block_forward.1} parent=0 // pred_fallthru
    _

</llo_original>
